<compile_context>
chip_gen: v6e
topology: v6e:2x2x1
jax: 0.10.0
libtpu: 0.0.40
codegen_flags: <defaults>
</compile_context>

<pallas_src>
import jax
import jax.numpy as jnp
from jax.experimental import pallas as pl
from jax.experimental.pallas import tpu as pltpu


def _round_up(x, m):
    return (x + m - 1) // m * m


def _default_row_tile():
    # 256 matches the 2x256^2 MXU on v6e/v7x; 128 for the 4x128^2 MXU on v5e.
    try:
        kind = jax.devices()[0].device_kind.lower()
    except Exception:
        return 256
    if "v5 lite" in kind or "v5e" in kind or "v5lite" in kind:
        return 128
    return 256


def _gemm_bias_glu_kernel(patch_ref, w_ref, b_ref, out_ref):
    # patch_ref: (row_tile, KC_pad) bf16
    # w_ref:     (KC_pad, 2*C_half_pad) bf16   b_ref: (1, 2*C_half_pad) f32
    # out_ref:   (row_tile, C_half_pad) f32
    y = jnp.dot(patch_ref[...], w_ref[...], preferred_element_type=jnp.float32)
    y = y + b_ref[...]
    c_half = out_ref.shape[-1]
    a = y[:, :c_half]          # first half of channels (128-aligned slice)
    g = y[:, c_half:]          # gate half
    out_ref[...] = (a * jax.nn.sigmoid(g)).astype(out_ref.dtype)


def conv1d_glu_layer(x, w, b, kernel_size, stride=8, time_major_out=False):
    """nn.Conv1d(stride=stride, padding=k//2) followed by GLU over channels.

    x: (B, T_in, C_in) f32, channels-last.
    w: (C_out2, C_in, K)  (PyTorch Conv1d weight layout).   b: (C_out2,)
    Returns (B, T_out, C_out2//2), or (T_out, B, C_out2//2) if time_major_out.
    """
    B, T_in, C_in = x.shape
    C_out2 = w.shape[0]
    C_half = C_out2 // 2
    K = kernel_size
    pad = K // 2
    T_out = (T_in + 2 * pad - K) // stride + 1

    KC = K * C_in
    KC_pad = _round_up(KC, 128)           # lane-aligned contraction dim
    C_half_pad = _round_up(C_half, 128)   # lane-dense output stores
    Cp2 = 2 * C_half_pad

    # ---- XLA glue: zero-pad time, extract strided im2col patches ----
    x_pad = jnp.pad(x, ((0, 0), (pad, pad), (0, 0)))
    taps = [x_pad[:, j:j + (T_out - 1) * stride + 1:stride, :] for j in range(K)]
    patches = jnp.stack(taps, axis=2)                     # (B, T_out, K, C_in)
    if time_major_out:
        patches = jnp.transpose(patches, (1, 0, 2, 3))    # (T_out, B, K, C_in)
    patches = patches.reshape(-1, KC)                     # (R, K*C_in), tap-major cols
    R = patches.shape[0]

    row_tile = min(_default_row_tile(), _round_up(R, 8))
    R_pad = _round_up(R, row_tile)
    patches = jnp.pad(patches.astype(jnp.bfloat16),
                      ((0, R_pad - R), (0, KC_pad - KC)))

    # ---- weight/bias: tap-major flattening; GLU halves padded separately ----
    w_mat = jnp.transpose(w, (2, 1, 0)).reshape(KC, C_out2)       # (K*C_in, C_out2)
    w_a = jnp.pad(w_mat[:, :C_half], ((0, KC_pad - KC), (0, C_half_pad - C_half)))
    w_g = jnp.pad(w_mat[:, C_half:], ((0, KC_pad - KC), (0, C_half_pad - C_half)))
    w_pad = jnp.concatenate([w_a, w_g], axis=1).astype(jnp.bfloat16)

    b_a = jnp.pad(b[:C_half], (0, C_half_pad - C_half))
    b_g = jnp.pad(b[C_half:], (0, C_half_pad - C_half))
    b_pad = jnp.concatenate([b_a, b_g]).reshape(1, Cp2).astype(jnp.float32)

    out = pl.pallas_call(
        _gemm_bias_glu_kernel,
        out_shape=jax.ShapeDtypeStruct((R_pad, C_half_pad), jnp.float32),
        grid=(R_pad // row_tile,),
        in_specs=[
            pl.BlockSpec((row_tile, KC_pad), lambda r: (r, 0)),
            # Weight/bias use constant index_maps -> fetched once and kept
            # resident across grid steps.  (At production sizes,
            # pipeline_mode=pl.Buffered(1) would additionally halve their
            # VMEM copies; unnecessary at these shapes.)
            pl.BlockSpec((KC_pad, Cp2), lambda r: (0, 0)),
            pl.BlockSpec((1, Cp2), lambda r: (0, 0)),
        ],
        out_specs=pl.BlockSpec((row_tile, C_half_pad), lambda r: (r, 0)),
        compiler_params=pltpu.CompilerParams(
            dimension_semantics=("parallel",)),
    )(patches, w_pad, b_pad)

    out = out[:R, :C_half]
    if time_major_out:
        return out.reshape(T_out, B, C_half)
    return out.reshape(B, T_out, C_half)


class Conv1dSubsampler:
    """JAX/Pallas port of the fairseq Conv1dSubsampler forward pass."""

    def __init__(self, in_channels, mid_channels, out_channels,
                 kernel_sizes=(3, 3), stride=8, key=jax.random.PRNGKey(0)):
        self.n_layers = len(kernel_sizes)
        self.kernel_sizes = list(kernel_sizes)
        self.stride = stride
        self.weights, self.biases = [], []
        for i, k in enumerate(kernel_sizes):
            c_in = in_channels if i == 0 else mid_channels // 2
            c_out = mid_channels if i < self.n_layers - 1 else out_channels * 2
            key, k1, k2 = jax.random.split(key, 3)
            self.weights.append(0.1 * jax.random.normal(k1, (c_out, c_in, k), jnp.float32))
            self.biases.append(0.1 * jax.random.normal(k2, (c_out,), jnp.float32))

    def get_out_seq_lens(self, in_seq_lens):
        if in_seq_lens is None:
            return None
        out = in_seq_lens
        for _ in range(self.n_layers):
            out = jnp.floor((out.astype(jnp.float32) - 1.0) / float(self.stride)
                            + 1.0).astype(jnp.int32)
        return out

    def __call__(self, src_tokens, src_lengths):
        x = src_tokens                                   # (B, T_in, C_in)
        for i, k in enumerate(self.kernel_sizes):
            x = conv1d_glu_layer(x, self.weights[i], self.biases[i], k,
                                 stride=self.stride,
                                 time_major_out=(i == self.n_layers - 1))
        # last layer already emitted (T_out, B, C): no post-kernel transpose.
        return x, self.get_out_seq_lens(src_lengths)


def _reference_forward(model, src_tokens, src_lengths):
    """Pure-JAX f32 reference using lax.conv_general_dilated (NCL like PyTorch)."""
    x = jnp.transpose(src_tokens, (0, 2, 1))  # (B, C, T)
    for i, k in enumerate(model.kernel_sizes):
        y = jax.lax.conv_general_dilated(
            x, model.weights[i], window_strides=(model.stride,),
            padding=[(k // 2, k // 2)],
            dimension_numbers=("NCH", "OIH", "NCH"))
        y = y + model.biases[i][None, :, None]
        c_half = y.shape[1] // 2
        x = y[:, :c_half] * jax.nn.sigmoid(y[:, c_half:])
    x = jnp.transpose(x, (2, 0, 1))  # (T, B, C)
    return x, model.get_out_seq_lens(src_lengths)


if __name__ == "__main__":
    key = jax.random.PRNGKey(0)
    k_in, k_model = jax.random.split(key)

    B, T_in, C_in = 2, 80, 8
    mid_channels, out_channels = 16, 8

    src_tokens = jax.random.normal(k_in, (B, T_in, C_in), jnp.float32)
    src_lengths = jnp.array([80, 72], jnp.int32)

    model = Conv1dSubsampler(C_in, mid_channels, out_channels,
                             kernel_sizes=(3, 3), key=k_model)

    fwd = jax.jit(lambda t, l: model(t, l))
    out, out_lens = fwd(src_tokens, src_lengths)
    out = jax.block_until_ready(out)
    out_lens = jax.block_until_ready(out_lens)

    ref_out, ref_lens = _reference_forward(model, src_tokens, src_lengths)
    assert out.shape == ref_out.shape, (out.shape, ref_out.shape)
    # bf16 MXU inputs with f32 accumulation vs. f32 reference -> relaxed tol.
    assert jnp.allclose(out, ref_out, atol=2e-2, rtol=2e-2)
    assert jnp.array_equal(out_lens, ref_lens)

    print("KERNEL_OK")
</pallas_src>

<mosaic_0001>
module attributes {stable_mosaic.version = 11 : i64} {
  func.func @_gemm_bias_glu_kernel(%arg0: i32, %arg1: memref<24x128xbf16, #tpu.memory_space<vmem>>, %arg2: memref<128x256xbf16, #tpu.memory_space<vmem>>, %arg3: memref<1x256xf32, #tpu.memory_space<vmem>>, %arg4: memref<24x128xf32, #tpu.memory_space<vmem>>) attributes {dimension_semantics = [#tpu.dimension_semantics<parallel>], iteration_bounds = array<i64: 1>, scalar_prefetch = 0 : i64, scratch_operands = 0 : i64, tpu.core_type = #tpu.core_type<tc>, window_params = [{transform_indices = @transform_0, window_bounds = array<i64: 24, 128>}, {pipeline_mode = #tpu.pipeline_mode<synchronous>, transform_indices = @transform_1, window_bounds = array<i64: 128, 256>}, {pipeline_mode = #tpu.pipeline_mode<synchronous>, transform_indices = @transform_2, window_bounds = array<i64: 1, 256>}, {transform_indices = @transform_3, window_bounds = array<i64: 24, 128>}]} {
    %c0 = arith.constant 0 : index
    %c0_0 = arith.constant 0 : index
    %0 = vector.load %arg1[%c0, %c0_0] : memref<24x128xbf16, #tpu.memory_space<vmem>>, vector<24x128xbf16>
    %c0_1 = arith.constant 0 : index
    %c0_2 = arith.constant 0 : index
    %1 = vector.load %arg2[%c0_1, %c0_2] : memref<128x256xbf16, #tpu.memory_space<vmem>>, vector<128x256xbf16>
    %cst = arith.constant dense<0.000000e+00> : vector<24x256xf32>
    %2 = tpu.matmul %0, %1, %cst {dimension_numbers = #tpu.dot_dimension_numbers<[1], [0], [0], [1], [0, 0, 1, 1], [], []>} : vector<24x128xbf16>, vector<128x256xbf16>, vector<24x256xf32> -> vector<24x256xf32>
    %c0_3 = arith.constant 0 : index
    %c0_4 = arith.constant 0 : index
    %3 = vector.load %arg3[%c0_3, %c0_4] : memref<1x256xf32, #tpu.memory_space<vmem>>, vector<1x256xf32>
    %4 = vector.broadcast %3 : vector<1x256xf32> to vector<24x256xf32>
    %5 = arith.addf %2, %4 : vector<24x256xf32>
    %6 = vector.extract_strided_slice %5 {offsets = [0, 0], sizes = [24, 128], strides = [1, 1]} : vector<24x256xf32> to vector<24x128xf32>
    %7 = vector.extract_strided_slice %5 {offsets = [0, 128], sizes = [24, 128], strides = [1, 1]} : vector<24x256xf32> to vector<24x128xf32>
    %8 = arith.negf %7 : vector<24x128xf32>
    %9 = math.exp %8 : vector<24x128xf32>
    %cst_5 = arith.constant 1.000000e+00 : f32
    %10 = vector.broadcast %cst_5 : f32 to vector<24x128xf32>
    %11 = arith.addf %10, %9 : vector<24x128xf32>
    %12 = arith.divf %10, %11 : vector<24x128xf32>
    %13 = arith.mulf %6, %12 : vector<24x128xf32>
    %c0_6 = arith.constant 0 : index
    %c0_7 = arith.constant 0 : index
    %14 = vector.load %arg4[%c0_6, %c0_7] : memref<24x128xf32, #tpu.memory_space<vmem>>, vector<24x128xf32>
    tpu.vector_store %arg4[%c0_6, %c0_7], %13 {strides = array<i32>} : memref<24x128xf32, #tpu.memory_space<vmem>>, vector<24x128xf32>,
    return
  }
  func.func @transform_0(%arg0: i32) -> (i32, i32) {
    %c0_i32 = arith.constant 0 : i32
    %c0_i32_0 = arith.constant 0 : i32
    return %arg0, %c0_i32 : i32, i32
  }
  func.func @transform_1(%arg0: i32) -> (i32, i32) {
    %c0_i32 = arith.constant 0 : i32
    %c0_i32_0 = arith.constant 0 : i32
    %c0_i32_1 = arith.constant 0 : i32
    return %c0_i32, %c0_i32_0 : i32, i32
  }
  func.func @transform_2(%arg0: i32) -> (i32, i32) {
    %c0_i32 = arith.constant 0 : i32
    %c0_i32_0 = arith.constant 0 : i32
    %c0_i32_1 = arith.constant 0 : i32
    return %c0_i32, %c0_i32_0 : i32, i32
  }
  func.func @transform_3(%arg0: i32) -> (i32, i32) {
    %c0_i32 = arith.constant 0 : i32
    %c0_i32_0 = arith.constant 0 : i32
    return %arg0, %c0_i32 : i32, i32
  }
}

module attributes {stable_mosaic.version = 11 : i64} {
  func.func @_gemm_bias_glu_kernel(%arg0: i32, %arg1: memref<8x128xbf16, #tpu.memory_space<vmem>>, %arg2: memref<128x256xbf16, #tpu.memory_space<vmem>>, %arg3: memref<1x256xf32, #tpu.memory_space<vmem>>, %arg4: memref<8x128xf32, #tpu.memory_space<vmem>>) attributes {dimension_semantics = [#tpu.dimension_semantics<parallel>], iteration_bounds = array<i64: 1>, scalar_prefetch = 0 : i64, scratch_operands = 0 : i64, tpu.core_type = #tpu.core_type<tc>, window_params = [{transform_indices = @transform_0, window_bounds = array<i64: 8, 128>}, {pipeline_mode = #tpu.pipeline_mode<synchronous>, transform_indices = @transform_1, window_bounds = array<i64: 128, 256>}, {pipeline_mode = #tpu.pipeline_mode<synchronous>, transform_indices = @transform_2, window_bounds = array<i64: 1, 256>}, {transform_indices = @transform_3, window_bounds = array<i64: 8, 128>}]} {
    %c0 = arith.constant 0 : index
    %c0_0 = arith.constant 0 : index
    %0 = vector.load %arg1[%c0, %c0_0] : memref<8x128xbf16, #tpu.memory_space<vmem>>, vector<8x128xbf16>
    %c0_1 = arith.constant 0 : index
    %c0_2 = arith.constant 0 : index
    %1 = vector.load %arg2[%c0_1, %c0_2] : memref<128x256xbf16, #tpu.memory_space<vmem>>, vector<128x256xbf16>
    %cst = arith.constant dense<0.000000e+00> : vector<8x256xf32>
    %2 = tpu.matmul %0, %1, %cst {dimension_numbers = #tpu.dot_dimension_numbers<[1], [0], [0], [1], [0, 0, 1, 1], [], []>} : vector<8x128xbf16>, vector<128x256xbf16>, vector<8x256xf32> -> vector<8x256xf32>
    %c0_3 = arith.constant 0 : index
    %c0_4 = arith.constant 0 : index
    %3 = vector.load %arg3[%c0_3, %c0_4] : memref<1x256xf32, #tpu.memory_space<vmem>>, vector<1x256xf32>
    %4 = vector.broadcast %3 : vector<1x256xf32> to vector<8x256xf32>
    %5 = arith.addf %2, %4 : vector<8x256xf32>
    %6 = vector.extract_strided_slice %5 {offsets = [0, 0], sizes = [8, 128], strides = [1, 1]} : vector<8x256xf32> to vector<8x128xf32>
    %7 = vector.extract_strided_slice %5 {offsets = [0, 128], sizes = [8, 128], strides = [1, 1]} : vector<8x256xf32> to vector<8x128xf32>
    %8 = arith.negf %7 : vector<8x128xf32>
    %9 = math.exp %8 : vector<8x128xf32>
    %cst_5 = arith.constant 1.000000e+00 : f32
    %10 = vector.broadcast %cst_5 : f32 to vector<8x128xf32>
    %11 = arith.addf %10, %9 : vector<8x128xf32>
    %12 = arith.divf %10, %11 : vector<8x128xf32>
    %13 = arith.mulf %6, %12 : vector<8x128xf32>
    %c0_6 = arith.constant 0 : index
    %c0_7 = arith.constant 0 : index
    %14 = vector.load %arg4[%c0_6, %c0_7] : memref<8x128xf32, #tpu.memory_space<vmem>>, vector<8x128xf32>
    tpu.vector_store %arg4[%c0_6, %c0_7], %13 {strides = array<i32>} : memref<8x128xf32, #tpu.memory_space<vmem>>, vector<8x128xf32>,
    return
  }
  func.func @transform_0(%arg0: i32) -> (i32, i32) {
    %c0_i32 = arith.constant 0 : i32
    %c0_i32_0 = arith.constant 0 : i32
    return %arg0, %c0_i32 : i32, i32
  }
  func.func @transform_1(%arg0: i32) -> (i32, i32) {
    %c0_i32 = arith.constant 0 : i32
    %c0_i32_0 = arith.constant 0 : i32
    %c0_i32_1 = arith.constant 0 : i32
    return %c0_i32, %c0_i32_0 : i32, i32
  }
  func.func @transform_2(%arg0: i32) -> (i32, i32) {
    %c0_i32 = arith.constant 0 : i32
    %c0_i32_0 = arith.constant 0 : i32
    %c0_i32_1 = arith.constant 0 : i32
    return %c0_i32, %c0_i32_0 : i32, i32
  }
  func.func @transform_3(%arg0: i32) -> (i32, i32) {
    %c0_i32 = arith.constant 0 : i32
    %c0_i32_0 = arith.constant 0 : i32
    return %arg0, %c0_i32 : i32, i32
  }
}

</mosaic_0001>

<llo_original>
// kernel: _lambda_.2
$region0: #{_lambda_.2}
  #allocation0 [shape = 'u32[]', space=smem, size = 0x4, offset = 0x4, fixed_abs, tag = 'smem constant byte address 0x4 - core index']
  #allocation1 [shape = 'u32[144,128]{1,0:T(1,128)}', space=vmem, size = 0x12000, scoped, tag = 'internal scratch']
  %s0 = inlined_call_operand.vmem [shape: bf16[24,128], index: 0, kind: input, shape index: {}]
  %s1 = inlined_call_operand.vmem [shape: bf16[128,256], index: 1, kind: input, shape index: {}]
  %s2 = inlined_call_operand.vmem [shape: f32[1,256], index: 2, kind: input, shape index: {}]
  %s3 = inlined_call_operand.vmem [shape: f32[24,128], index: 3, kind: output, shape index: {}]
  %s4 = sld [smem:[#allocation0]]
  $region22: #{_lambda_.2} parent=0
    _
  %s6 = ssub.s32 1, %s4
  %s7 = scalar_select 0, %s6, %s4
  // Predicated region
  $region2: #{_lambda_.2} parent=0 // pred_check
    _
  $region3: #{_lambda_.2} parent=0 // pred_check_branch
    %9 = sbr.rel (0) target = $region5
  $region4: #{_lambda_.2} parent=0 // pred_region
    _
  $region5: #{_lambda_.2} parent=0 // pred_fallthru
    _
  // Predicated region
  $region6: #{_lambda_.2} parent=0 // pred_check
    _
  $region7: #{_lambda_.2} parent=0 // pred_check_branch
    %11 = sbr.rel (0) target = $region9
  $region8: #{_lambda_.2} parent=0 // pred_region
    _
  $region9: #{_lambda_.2} parent=0 // pred_fallthru
    _
  // Predicated region
  $region10: #{_lambda_.2} parent=0 // pred_check
    _
  $region11: #{_lambda_.2} parent=0 // pred_check_branch
    %13 = sbr.rel (0) target = $region13
  $region12: #{_lambda_.2} parent=0 // pred_region
    _
  $region13: #{_lambda_.2} parent=0 // pred_fallthru
    _
  %v15 = vld [vmem:[%s0] sm:$0xf]
  %v16 = vld [vmem:[%s0 + $0x4] sm:$0xf]
  %v17 = vld [vmem:[%s0 + $0x8] sm:$0xf]
  %v18 = vld [vmem:[%s1] sm:$0xff]
  %v19 = vld [vmem:[%s1 + $0x8] sm:$0xff]
  %v20 = vld [vmem:[%s1 + $0x10] sm:$0xff]
  %v21 = vld [vmem:[%s1 + $0x18] sm:$0xff]
  %v22 = vld [vmem:[%s1 + $0x20] sm:$0xff]
  %v23 = vld [vmem:[%s1 + $0x28] sm:$0xff]
  %v24 = vld [vmem:[%s1 + $0x30] sm:$0xff]
  %v25 = vld [vmem:[%s1 + $0x38] sm:$0xff]
  %v26 = vld [vmem:[%s1 + $0x40] sm:$0xff]
  %v27 = vld [vmem:[%s1 + $0x48] sm:$0xff]
  %v28 = vld [vmem:[%s1 + $0x50] sm:$0xff]
  %v29 = vld [vmem:[%s1 + $0x58] sm:$0xff]
  %v30 = vld [vmem:[%s1 + $0x60] sm:$0xff]
  %v31 = vld [vmem:[%s1 + $0x68] sm:$0xff]
  %v32 = vld [vmem:[%s1 + $0x70] sm:$0xff]
  %v33 = vld [vmem:[%s1 + $0x78] sm:$0xff]
  %v34 = vld [vmem:[%s2] sm:$0x3]
  %v36 = vlaneseq
  %v37 = vshrl.u32 %v36, 7
  %v38 = vsub.s32 0, %v37
  %v39 = vrot.slane %v34, %v38
  %v40 = vlaneseq
  %v41 = vshrl.u32 %v40, 7
  %v42 = vsub.s32 1, %v41
  %v43 = vrot.slane %v34, %v42
  %v49 = vunpack.c.l.b16 %v15
  %v50 = vunpack.c.l.b16 %v16
  %v51 = vunpack.c.l.b16 %v17
  %v52 = vpack.c.b16 %v50, %v49
  %v53 = vpack.c.b16 %v51, %v51
  %v72 = vunpack.c.l.b16 %v18
  %v73 = vunpack.c.h.b16 %v18
  %v74 = vunpack.c.l.b16 %v19
  %v75 = vunpack.c.h.b16 %v19
  %v76 = vunpack.c.l.b16 %v20
  %v77 = vunpack.c.h.b16 %v20
  %v78 = vunpack.c.l.b16 %v21
  %v79 = vunpack.c.h.b16 %v21
  %v80 = vunpack.c.l.b16 %v22
  %v81 = vunpack.c.h.b16 %v22
  %v82 = vunpack.c.l.b16 %v23
  %v83 = vunpack.c.h.b16 %v23
  %v84 = vunpack.c.l.b16 %v24
  %v85 = vunpack.c.h.b16 %v24
  %v86 = vunpack.c.l.b16 %v25
  %v87 = vunpack.c.h.b16 %v25
  %v88 = vunpack.c.l.b16 %v26
  %v89 = vunpack.c.h.b16 %v26
  %v90 = vunpack.c.l.b16 %v27
  %v91 = vunpack.c.h.b16 %v27
  %v92 = vunpack.c.l.b16 %v28
  %v93 = vunpack.c.h.b16 %v28
  %v94 = vunpack.c.l.b16 %v29
  %v95 = vunpack.c.h.b16 %v29
  %v96 = vunpack.c.l.b16 %v30
  %v97 = vunpack.c.h.b16 %v30
  %v98 = vunpack.c.l.b16 %v31
  %v99 = vunpack.c.h.b16 %v31
  %v100 = vunpack.c.l.b16 %v32
  %v101 = vunpack.c.h.b16 %v32
  %v102 = vunpack.c.l.b16 %v33
  %v103 = vunpack.c.h.b16 %v33
  %v104 = vpack.c.b16 %v74, %v72
  %v105 = vpack.c.b16 %v75, %v73
  %v106 = vpack.c.b16 %v78, %v76
  %v107 = vpack.c.b16 %v79, %v77
  %v108 = vpack.c.b16 %v82, %v80
  %v109 = vpack.c.b16 %v83, %v81
  %v110 = vpack.c.b16 %v86, %v84
  %v111 = vpack.c.b16 %v87, %v85
  %v112 = vpack.c.b16 %v90, %v88
  %v113 = vpack.c.b16 %v91, %v89
  %v114 = vpack.c.b16 %v94, %v92
  %v115 = vpack.c.b16 %v95, %v93
  %v116 = vpack.c.b16 %v98, %v96
  %v117 = vpack.c.b16 %v99, %v97
  %v118 = vpack.c.b16 %v102, %v100
  %v119 = vpack.c.b16 %v103, %v101
  %136 = vmatprep.subr.bf16.mxu0 %v119
  %137 = vmatpush1.bf16.msra.mxu0 %v118
  %138 = vmatprep.subr.bf16.mxu0 %v117
  %139 = vmatpush1.bf16.msra.mxu0 %v116
  %140 = vmatprep.subr.bf16.mxu0 %v115
  %141 = vmatpush1.bf16.msra.mxu0 %v114
  %142 = vmatprep.subr.bf16.mxu0 %v113
  %143 = vmatpush1.bf16.msra.mxu0 %v112
  %144 = vmatprep.subr.bf16.mxu0 %v111
  %145 = vmatpush1.bf16.msra.mxu0 %v110
  %146 = vmatprep.subr.bf16.mxu0 %v109
  %147 = vmatpush1.bf16.msra.mxu0 %v108
  %148 = vmatprep.subr.bf16.mxu0 %v107
  %149 = vmatpush1.bf16.msra.mxu0 %v106
  %150 = vmatprep.subr.bf16.mxu0 %v105
  %151 = vmatpush1.bf16.msra.mxu0 %v104
  %152 = vmatprep.subr.bf16.mxu0 0
  %153 = vmatpush2.bf16.msra.mxu0 0
  %154 = vmatprep.subr.bf16.mxu0 0
  %155 = vmatpush2.bf16.msra.mxu0 0
  %156 = vmatprep.subr.bf16.mxu0 0
  %157 = vmatpush2.bf16.msra.mxu0 0
  %158 = vmatprep.subr.bf16.mxu0 0
  %159 = vmatpush2.bf16.msra.mxu0 0
  %160 = vmatprep.subr.bf16.mxu0 0
  %161 = vmatpush2.bf16.msra.mxu0 0
  %162 = vmatprep.subr.bf16.mxu0 0
  %163 = vmatpush2.bf16.msra.mxu0 0
  %164 = vmatprep.subr.bf16.mxu0 0
  %165 = vmatpush2.bf16.msra.mxu0 0
  %166 = vmatprep.subr.bf16.mxu0 0
  %167 = vmatpush2.bf16.msra.mxu0 0
  %168 = vmatprep.mubr.bf16.mxu0 0
  %169 = vmatmul.mubr.bf16.gmra.mxu0 %v52
  %v170 = vpop.f32.mrf.mxu0
  %v171 = vadd.f32 %v39, %v170
  %v172 = vpop.f32.mrf.mxu0
  %v173 = vadd.f32 %v43, %v172
  %v174 = vpop.f32.mrf.mxu0
  %v175 = vadd.f32 %v39, %v174
  %v176 = vpop.f32.mrf.mxu0
  %v177 = vadd.f32 %v43, %v176
  %178 = vmatprep.mubr.bf16.mxu0 0
  %179 = vmatmul.mubr.bf16.gmra.mxu0 %v53
  %v180 = vpop.f32.mrf.mxu0
  %v181 = vadd.f32 %v39, %v180
  %v182 = vpop.f32.mrf.mxu0
  %v183 = vadd.f32 %v43, %v182
  %v184 = vpop.f32.mrf.mxu0
  %v185 = vpop.f32.mrf.mxu0
  %186 = vdwg.mxu0
  %v187 = vxor.u32 %v173, 2147483648
  %v188 = vxor.u32 %v177, 2147483648
  %v189 = vxor.u32 %v183, 2147483648
  %v190 = vmul.f32 %v187, 1.442695
  %v191 = vpow.pop %v190
  %v192 = vmul.f32 %v188, 1.442695
  %v193 = vpow.pop %v192
  %v194 = vmul.f32 %v189, 1.442695
  %v195 = vpow.pop %v194
  %v196 = vadd.f32 %v191, 1.0
  %v197 = vadd.f32 %v193, 1.0
  %v198 = vadd.f32 %v195, 1.0
  %v199 = vrcp.pop %v196
  %v200 = vmul.f32 1.0, %v199
  %v201 = vrcp.pop %v197
  %v202 = vmul.f32 1.0, %v201
  %v203 = vrcp.pop %v198
  %v204 = vmul.f32 1.0, %v203
  %v205 = vmul.f32 %v171, %v200
  %v206 = vmul.f32 %v175, %v202
  %v207 = vmul.f32 %v181, %v204
  %208 = vst [vmem:[%s3] sm:$0xff] %v205
  %209 = vst [vmem:[%s3 + $0x8] sm:$0xff] %v206
  %210 = vst [vmem:[%s3 + $0x10] sm:$0xff] %v207
  // Predicated region
  $region14: #{_lambda_.2} parent=0 // pred_check
    _
  $region15: #{_lambda_.2} parent=0 // pred_check_branch
    %212 = sbr.rel (0) target = $region17
  $region16: #{_lambda_.2} parent=0 // pred_region
    _
  $region17: #{_lambda_.2} parent=0 // pred_fallthru
    _
  // Predicated region
  $region18: #{_lambda_.2} parent=0 // pred_check
    _
  $region19: #{_lambda_.2} parent=0 // pred_check_branch
    %214 = sbr.rel (0) target = $region21
  $region20: #{_lambda_.2} parent=0 // pred_region
    _
  $region21: #{_lambda_.2} parent=0 // pred_fallthru
    _

// kernel: _lambda_.3
$region0: #{_lambda_.3}
  #allocation0 [shape = 'u32[]', space=smem, size = 0x4, offset = 0x4, fixed_abs, tag = 'smem constant byte address 0x4 - core index']
  #allocation1 [shape = 'u32[144,128]{1,0:T(1,128)}', space=vmem, size = 0x12000, scoped, tag = 'internal scratch']
  %s0 = inlined_call_operand.vmem [shape: bf16[8,128], index: 0, kind: input, shape index: {}]
  %s1 = inlined_call_operand.vmem [shape: bf16[128,256], index: 1, kind: input, shape index: {}]
  %s2 = inlined_call_operand.vmem [shape: f32[1,256], index: 2, kind: input, shape index: {}]
  %s3 = inlined_call_operand.vmem [shape: f32[8,128], index: 3, kind: output, shape index: {}]
  %s4 = sld [smem:[#allocation0]]
  $region22: #{_lambda_.3} parent=0
    _
  %s6 = ssub.s32 1, %s4
  %s7 = scalar_select 0, %s6, %s4
  // Predicated region
  $region2: #{_lambda_.3} parent=0 // pred_check
    _
  $region3: #{_lambda_.3} parent=0 // pred_check_branch
    %9 = sbr.rel (0) target = $region5
  $region4: #{_lambda_.3} parent=0 // pred_region
    _
  $region5: #{_lambda_.3} parent=0 // pred_fallthru
    _
  // Predicated region
  $region6: #{_lambda_.3} parent=0 // pred_check
    _
  $region7: #{_lambda_.3} parent=0 // pred_check_branch
    %11 = sbr.rel (0) target = $region9
  $region8: #{_lambda_.3} parent=0 // pred_region
    _
  $region9: #{_lambda_.3} parent=0 // pred_fallthru
    _
  // Predicated region
  $region10: #{_lambda_.3} parent=0 // pred_check
    _
  $region11: #{_lambda_.3} parent=0 // pred_check_branch
    %13 = sbr.rel (0) target = $region13
  $region12: #{_lambda_.3} parent=0 // pred_region
    _
  $region13: #{_lambda_.3} parent=0 // pred_fallthru
    _
  %v15 = vld [vmem:[%s0] sm:$0xf]
  %v16 = vld [vmem:[%s1] sm:$0xff]
  %v17 = vld [vmem:[%s1 + $0x8] sm:$0xff]
  %v18 = vld [vmem:[%s1 + $0x10] sm:$0xff]
  %v19 = vld [vmem:[%s1 + $0x18] sm:$0xff]
  %v20 = vld [vmem:[%s1 + $0x20] sm:$0xff]
  %v21 = vld [vmem:[%s1 + $0x28] sm:$0xff]
  %v22 = vld [vmem:[%s1 + $0x30] sm:$0xff]
  %v23 = vld [vmem:[%s1 + $0x38] sm:$0xff]
  %v24 = vld [vmem:[%s1 + $0x40] sm:$0xff]
  %v25 = vld [vmem:[%s1 + $0x48] sm:$0xff]
  %v26 = vld [vmem:[%s1 + $0x50] sm:$0xff]
  %v27 = vld [vmem:[%s1 + $0x58] sm:$0xff]
  %v28 = vld [vmem:[%s1 + $0x60] sm:$0xff]
  %v29 = vld [vmem:[%s1 + $0x68] sm:$0xff]
  %v30 = vld [vmem:[%s1 + $0x70] sm:$0xff]
  %v31 = vld [vmem:[%s1 + $0x78] sm:$0xff]
  %v32 = vld [vmem:[%s2] sm:$0x3]
  %v34 = vlaneseq
  %v35 = vshrl.u32 %v34, 7
  %v36 = vsub.s32 0, %v35
  %v37 = vrot.slane %v32, %v36
  %v38 = vlaneseq
  %v39 = vshrl.u32 %v38, 7
  %v40 = vsub.s32 1, %v39
  %v41 = vrot.slane %v32, %v40
  %v60 = vunpack.c.l.b16 %v16
  %v61 = vunpack.c.h.b16 %v16
  %v62 = vunpack.c.l.b16 %v17
  %v63 = vunpack.c.h.b16 %v17
  %v64 = vunpack.c.l.b16 %v18
  %v65 = vunpack.c.h.b16 %v18
  %v66 = vunpack.c.l.b16 %v19
  %v67 = vunpack.c.h.b16 %v19
  %v68 = vunpack.c.l.b16 %v20
  %v69 = vunpack.c.h.b16 %v20
  %v70 = vunpack.c.l.b16 %v21
  %v71 = vunpack.c.h.b16 %v21
  %v72 = vunpack.c.l.b16 %v22
  %v73 = vunpack.c.h.b16 %v22
  %v74 = vunpack.c.l.b16 %v23
  %v75 = vunpack.c.h.b16 %v23
  %v76 = vunpack.c.l.b16 %v24
  %v77 = vunpack.c.h.b16 %v24
  %v78 = vunpack.c.l.b16 %v25
  %v79 = vunpack.c.h.b16 %v25
  %v80 = vunpack.c.l.b16 %v26
  %v81 = vunpack.c.h.b16 %v26
  %v82 = vunpack.c.l.b16 %v27
  %v83 = vunpack.c.h.b16 %v27
  %v84 = vunpack.c.l.b16 %v28
  %v85 = vunpack.c.h.b16 %v28
  %v86 = vunpack.c.l.b16 %v29
  %v87 = vunpack.c.h.b16 %v29
  %v88 = vunpack.c.l.b16 %v30
  %v89 = vunpack.c.h.b16 %v30
  %v90 = vunpack.c.l.b16 %v31
  %v91 = vunpack.c.h.b16 %v31
  %v92 = vpack.c.b16 %v62, %v60
  %v93 = vpack.c.b16 %v63, %v61
  %v94 = vpack.c.b16 %v66, %v64
  %v95 = vpack.c.b16 %v67, %v65
  %v96 = vpack.c.b16 %v70, %v68
  %v97 = vpack.c.b16 %v71, %v69
  %v98 = vpack.c.b16 %v74, %v72
  %v99 = vpack.c.b16 %v75, %v73
  %v100 = vpack.c.b16 %v78, %v76
  %v101 = vpack.c.b16 %v79, %v77
  %v102 = vpack.c.b16 %v82, %v80
  %v103 = vpack.c.b16 %v83, %v81
  %v104 = vpack.c.b16 %v86, %v84
  %v105 = vpack.c.b16 %v87, %v85
  %v106 = vpack.c.b16 %v90, %v88
  %v107 = vpack.c.b16 %v91, %v89
  %124 = vmatprep.subr.bf16.mxu0 %v107
  %125 = vmatpush1.bf16.msra.mxu0 %v106
  %126 = vmatprep.subr.bf16.mxu0 %v105
  %127 = vmatpush1.bf16.msra.mxu0 %v104
  %128 = vmatprep.subr.bf16.mxu0 %v103
  %129 = vmatpush1.bf16.msra.mxu0 %v102
  %130 = vmatprep.subr.bf16.mxu0 %v101
  %131 = vmatpush1.bf16.msra.mxu0 %v100
  %132 = vmatprep.subr.bf16.mxu0 %v99
  %133 = vmatpush1.bf16.msra.mxu0 %v98
  %134 = vmatprep.subr.bf16.mxu0 %v97
  %135 = vmatpush1.bf16.msra.mxu0 %v96
  %136 = vmatprep.subr.bf16.mxu0 %v95
  %137 = vmatpush1.bf16.msra.mxu0 %v94
  %138 = vmatprep.subr.bf16.mxu0 %v93
  %139 = vmatpush1.bf16.msra.mxu0 %v92
  %140 = vmatprep.subr.bf16.mxu0 0
  %141 = vmatpush2.bf16.msra.mxu0 0
  %142 = vmatprep.subr.bf16.mxu0 0
  %143 = vmatpush2.bf16.msra.mxu0 0
  %144 = vmatprep.subr.bf16.mxu0 0
  %145 = vmatpush2.bf16.msra.mxu0 0
  %146 = vmatprep.subr.bf16.mxu0 0
  %147 = vmatpush2.bf16.msra.mxu0 0
  %148 = vmatprep.subr.bf16.mxu0 0
  %149 = vmatpush2.bf16.msra.mxu0 0
  %150 = vmatprep.subr.bf16.mxu0 0
  %151 = vmatpush2.bf16.msra.mxu0 0
  %152 = vmatprep.subr.bf16.mxu0 0
  %153 = vmatpush2.bf16.msra.mxu0 0
  %154 = vmatprep.subr.bf16.mxu0 0
  %155 = vmatpush2.bf16.msra.mxu0 0
  %156 = vmatprep.mubr.bf16.mxu0 0
  %157 = vmatmul.mubr.bf16.gmra.mxu0 %v15
  %v158 = vpop.f32.mrf.mxu0
  %v159 = vadd.f32 %v37, %v158
  %v160 = vpop.f32.mrf.mxu0
  %v161 = vadd.f32 %v41, %v160
  %v162 = vpop.f32.mrf.mxu0
  %v163 = vpop.f32.mrf.mxu0
  %164 = vdwg.mxu0
  %v165 = vxor.u32 %v161, 2147483648
  %v166 = vmul.f32 %v165, 1.442695
  %v167 = vpow.pop %v166
  %v168 = vadd.f32 %v167, 1.0
  %v169 = vrcp.pop %v168
  %v170 = vmul.f32 1.0, %v169
  %v171 = vmul.f32 %v159, %v170
  %172 = vst [vmem:[%s3] sm:$0xff] %v171
  // Predicated region
  $region14: #{_lambda_.3} parent=0 // pred_check
    _
  $region15: #{_lambda_.3} parent=0 // pred_check_branch
    %174 = sbr.rel (0) target = $region17
  $region16: #{_lambda_.3} parent=0 // pred_region
    _
  $region17: #{_lambda_.3} parent=0 // pred_fallthru
    _
  // Predicated region
  $region18: #{_lambda_.3} parent=0 // pred_check
    _
  $region19: #{_lambda_.3} parent=0 // pred_check_branch
    %176 = sbr.rel (0) target = $region21
  $region20: #{_lambda_.3} parent=0 // pred_region
    _
  $region21: #{_lambda_.3} parent=0 // pred_fallthru
    _

</llo_original>
